<compile_context>
chip_gen: v5e
topology: v5e:2x2
jax: 0.10.0
libtpu: 0.0.40
codegen_flags: <defaults>
</compile_context>

<pallas_src>
import functools
import math

import jax
import jax.numpy as jnp
from jax.experimental import pallas as pl
from jax.experimental.pallas import tpu as pltpu


# ----------------------------------------------------------------------------
# helpers usable inside kernels (pure jnp, f32)
# ----------------------------------------------------------------------------
def _layer_norm(x, gamma, beta, eps=1e-5):
    mu = jnp.mean(x, axis=-1, keepdims=True)
    xc = x - mu
    var = jnp.mean(xc * xc, axis=-1, keepdims=True)
    return xc * jax.lax.rsqrt(var + eps) * gamma + beta


# ----------------------------------------------------------------------------
# kernel 1: 1x1 conv (input_proj), reading NCHW directly (no host transpose)
# ----------------------------------------------------------------------------
def _conv1x1_kernel(x_ref, w_ref, b_ref, o_ref):
    x = x_ref[0].astype(jnp.bfloat16)            # (Cin, HW_t)
    # contract Cin axis of the (transposed) LHS on the MXU: -> (HW_t, Cout)
    y = jax.lax.dot_general(x, w_ref[...], (((0,), (0,)), ((), ())),
                            preferred_element_type=jnp.float32)
    o_ref[0] = (y + b_ref[...]).astype(o_ref.dtype)


def conv1x1_proj(x_nchw, w_bf16, b_f32, *, block_hw=512, vmem_limit_bytes=None):
    """x_nchw: [N, Cin, H, W]; w: [Cin, Cout] bf16; b: [1, Cout] f32
    -> [N, H*W, Cout] bf16 (token order (n, h, w))."""
    N, Cin, H, W = x_nchw.shape
    Cout = w_bf16.shape[1]
    HW = H * W
    block_hw = min(block_hw, HW)
    assert HW % block_hw == 0, "H*W must divide the conv spatial tile"
    x3 = x_nchw.reshape(N, Cin, HW)              # pure reshape, no data movement

    return pl.pallas_call(
        _conv1x1_kernel,
        out_shape=jax.ShapeDtypeStruct((N, HW, Cout), jnp.bfloat16),
        grid_spec=pltpu.PrefetchScalarGridSpec(
            num_scalar_prefetch=0,
            grid=(N, HW // block_hw),
            in_specs=[
                pl.BlockSpec((1, Cin, block_hw), lambda n, t: (n, 0, t)),
                pl.BlockSpec((Cin, Cout), lambda n, t: (0, 0)),
                pl.BlockSpec((1, Cout), lambda n, t: (0, 0)),
            ],
            out_specs=pl.BlockSpec((1, block_hw, Cout), lambda n, t: (n, t, 0)),
        ),
        compiler_params=pltpu.CompilerParams(
            dimension_semantics=("parallel", "parallel"),
            vmem_limit_bytes=vmem_limit_bytes),
    )(x3, w_bf16, b_f32)


# ----------------------------------------------------------------------------
# kernel 2: fused QKV projection, lane-dense (B, S, C) outputs
# ----------------------------------------------------------------------------
def _qkv_kernel(x_ref, pos_ref, wqk_ref, bqk_ref, wv_ref, bv_ref,
                q_out, k_out, v_out):
    x = x_ref[0]                                      # (TS, C) bf16
    p = pos_ref[0]                                    # (TS, C) bf16
    xq = (x.astype(jnp.float32) + p.astype(jnp.float32)).astype(jnp.bfloat16)
    C = x.shape[1]

    # one MXU-dense matmul for q|k (scale already folded into the q columns)
    qk = jnp.dot(xq, wqk_ref[...], preferred_element_type=jnp.float32) + bqk_ref[...]
    v = jnp.dot(x, wv_ref[...], preferred_element_type=jnp.float32) + bv_ref[...]

    q_out[0] = qk[:, :C].astype(q_out.dtype)
    k_out[0] = qk[:, C:].astype(k_out.dtype)
    v_out[0] = v.astype(v_out.dtype)


def qkv_project(x_bsc, pos_bsc, lp, *, block_s=256, vmem_limit_bytes=None):
    B, S, C = x_bsc.shape
    block_s = min(block_s, S)
    assert S % block_s == 0

    tok = pl.BlockSpec((1, block_s, C), lambda b, s: (b, s, 0))

    def const(shape):
        return pl.BlockSpec(shape, lambda b, s: (0,) * len(shape))

    out_spec = pl.BlockSpec((1, block_s, C), lambda b, s: (b, s, 0))
    out_sd = jax.ShapeDtypeStruct((B, S, C), jnp.bfloat16)

    return pl.pallas_call(
        _qkv_kernel,
        out_shape=(out_sd, out_sd, out_sd),
        grid_spec=pltpu.PrefetchScalarGridSpec(
            num_scalar_prefetch=0,
            grid=(B, S // block_s),
            in_specs=[
                tok, tok,
                const((C, 2 * C)), const((1, 2 * C)),    # wqk, bqk
                const((C, C)), const((1, C)),            # wv,  bv
            ],
            out_specs=[out_spec, out_spec, out_spec],
        ),
        compiler_params=pltpu.CompilerParams(
            dimension_semantics=("parallel", "parallel"),
            vmem_limit_bytes=vmem_limit_bytes),
    )(x_bsc, pos_bsc, lp["wqk"], lp["bqk"], lp["wv"], lp["bv"])


# ----------------------------------------------------------------------------
# kernel 3: flash-style attention (online softmax over KV tiles); heads are
#           split in-kernel by static lane slices.  Out-projection + residual
#           + LN + FFN + LN are fused into the last-KV epilogue.
# ----------------------------------------------------------------------------
def _attn_ffn_kernel(x_ref, q_ref, k_ref, v_ref, wo, bo, g1, be1,
                     w1, b1, w2, b2, g2, be2, o_ref,
                     m_sc, l_sc, acc_sc, *, nheads):
    kv = pl.program_id(2)

    @pl.when(kv == 0)
    def _init():
        m_sc[...] = jnp.full(m_sc.shape, -jnp.inf, jnp.float32)
        l_sc[...] = jnp.zeros(l_sc.shape, jnp.float32)
        acc_sc[...] = jnp.zeros(acc_sc.shape, jnp.float32)

    q = q_ref[0]                 # (TQ, C) bf16, q already scaled by 1/sqrt(hd)
    k = k_ref[0]                 # (TK, C) bf16
    v = v_ref[0]                 # (TK, C) bf16
    C = q.shape[-1]
    hd = C // nheads

    # static per-head loop: 2-D ops only (no 3-D transposes / relayouts)
    for h in range(nheads):
        qh = q[:, h * hd:(h + 1) * hd]                 # (TQ, hd)
        kh = k[:, h * hd:(h + 1) * hd]                 # (TK, hd)
        vh = v[:, h * hd:(h + 1) * hd]                 # (TK, hd)
        s = jax.lax.dot_general(qh, kh, (((1,), (1,)), ((), ())),
                                preferred_element_type=jnp.float32)   # (TQ, TK)
        m_prev = m_sc[h]                               # (TQ, 1)
        m_new = jnp.maximum(m_prev, jnp.max(s, axis=-1, keepdims=True))
        alpha = jnp.exp(m_prev - m_new)
        p = jnp.exp(s - m_new)
        l_sc[h] = alpha * l_sc[h] + jnp.sum(p, axis=-1, keepdims=True)
        acc_sc[h] = alpha * acc_sc[h] + jnp.dot(
            p.astype(jnp.bfloat16), vh, preferred_element_type=jnp.float32)
        m_sc[h] = m_new

    @pl.when(kv == pl.num_programs(2) - 1)
    def _finish():
        # normalize (EUP reciprocal) and lane-concat heads -> (TQ, C)
        out = jnp.concatenate(
            [acc_sc[h] * pl.reciprocal(l_sc[h], approx=True)
             for h in range(nheads)], axis=-1)
        # single MXU-dense out-projection (K = C)
        src2 = jnp.dot(out.astype(jnp.bfloat16), wo[...],
                       preferred_element_type=jnp.float32) + bo[...]

        x = x_ref[0].astype(jnp.float32)               # (TQ, C) residual
        x1 = _layer_norm(x + src2, g1[...], be1[...])

        hid = jnp.dot(x1.astype(jnp.bfloat16), w1[...],
                      preferred_element_type=jnp.float32) + b1[...]
        # TODO(synk): exact erf gelu if bit-parity with PyTorch F.gelu is required
        hid = jax.nn.gelu(hid, approximate=True)
        ff = jnp.dot(hid.astype(jnp.bfloat16), w2[...],
                     preferred_element_type=jnp.float32) + b2[...]

        o_ref[0] = _layer_norm(x1 + ff, g2[...], be2[...]).astype(o_ref.dtype)


def attn_ffn(x_bsc, q, k, v, lp, nheads, *, block_q=128, block_kv=128,
             vmem_limit_bytes=None):
    B, S, C = x_bsc.shape
    hd = C // nheads
    F = lp["w1"].shape[1]
    block_q = min(block_q, S)
    block_kv = min(block_kv, S)
    assert S % block_q == 0 and S % block_kv == 0

    def const(shape):
        return pl.BlockSpec(shape, lambda b, qi, ki: (0,) * len(shape))

    in_specs = [
        pl.BlockSpec((1, block_q, C), lambda b, qi, ki: (b, qi, 0)),    # x (residual)
        pl.BlockSpec((1, block_q, C), lambda b, qi, ki: (b, qi, 0)),    # q
        pl.BlockSpec((1, block_kv, C), lambda b, qi, ki: (b, ki, 0)),   # k
        pl.BlockSpec((1, block_kv, C), lambda b, qi, ki: (b, ki, 0)),   # v
        const((C, C)), const((1, C)),        # wo, bo
        const((1, C)), const((1, C)),        # ln1 gamma, beta
        const((C, F)), const((1, F)),        # w1, b1
        const((F, C)), const((1, C)),        # w2, b2
        const((1, C)), const((1, C)),        # ln2 gamma, beta
    ]
    out_spec = pl.BlockSpec((1, block_q, C), lambda b, qi, ki: (b, qi, 0))

    return pl.pallas_call(
        functools.partial(_attn_ffn_kernel, nheads=nheads),
        out_shape=jax.ShapeDtypeStruct((B, S, C), jnp.bfloat16),
        grid_spec=pltpu.PrefetchScalarGridSpec(
            num_scalar_prefetch=0,
            grid=(B, S // block_q, S // block_kv),      # KV (reduction) innermost
            in_specs=in_specs,
            out_specs=out_spec,
            scratch_shapes=[
                pltpu.VMEM((nheads, block_q, 1), jnp.float32),    # running max
                pltpu.VMEM((nheads, block_q, 1), jnp.float32),    # running sum
                pltpu.VMEM((nheads, block_q, hd), jnp.float32),   # accumulator
            ],
        ),
        # B and S//block_q stay "parallel" so v7x's two TensorCores both get
        # blocks; vmem_limit_bytes overrides the 16/32 MiB scoped defaults.
        compiler_params=pltpu.CompilerParams(
            dimension_semantics=("parallel", "parallel", "arbitrary"),
            vmem_limit_bytes=vmem_limit_bytes),
    )(x_bsc, q, k, v, lp["wo"], lp["bo"], lp["ln1_g"], lp["ln1_b"],
      lp["w1"], lp["b1"], lp["w2"], lp["b2"], lp["ln2_g"], lp["ln2_b"])


def encoder_layer(x_bsc, pos_bsc, lp, nheads, *, block_s, block_q, block_kv,
                  vmem_limit_bytes):
    q, k, v = qkv_project(x_bsc, pos_bsc, lp, block_s=block_s,
                          vmem_limit_bytes=vmem_limit_bytes)
    return attn_ffn(x_bsc, q, k, v, lp, nheads, block_q=block_q,
                    block_kv=block_kv, vmem_limit_bytes=vmem_limit_bytes)


# ----------------------------------------------------------------------------
# DETR-style sine spatial position embedding (plain-JAX glue, parameter free)
# ----------------------------------------------------------------------------
def sine_pos_embed(bsz, h, w, d_model, temperature=10000.0):
    num_pos_feats = d_model // 2
    ones = jnp.ones((bsz, h, w), jnp.float32)
    y_embed = jnp.cumsum(ones, axis=1)
    x_embed = jnp.cumsum(ones, axis=2)
    eps = 1e-6
    scale = 2.0 * math.pi
    y_embed = y_embed / (y_embed[:, -1:, :] + eps) * scale
    x_embed = x_embed / (x_embed[:, :, -1:] + eps) * scale
    dim_t = jnp.arange(num_pos_feats)
    dim_t = temperature ** (2.0 * (dim_t // 2).astype(jnp.float32) / num_pos_feats)
    pos_x = x_embed[..., None] / dim_t
    pos_y = y_embed[..., None] / dim_t
    pos_x = jnp.stack([jnp.sin(pos_x[..., 0::2]), jnp.cos(pos_x[..., 1::2])],
                      axis=4).reshape(bsz, h, w, num_pos_feats)
    pos_y = jnp.stack([jnp.sin(pos_y[..., 0::2]), jnp.cos(pos_y[..., 1::2])],
                      axis=4).reshape(bsz, h, w, num_pos_feats)
    return jnp.concatenate([pos_y, pos_x], axis=3)        # [bsz, h, w, d_model]


# ----------------------------------------------------------------------------
# full forward (mirrors SpatioTempEncoder.forward)
# ----------------------------------------------------------------------------
def spatio_temp_encoder_forward(src, params, *, bsz, seq_len, d_model, nheads,
                                block_hw=512, block_s=256, block_q=128,
                                block_kv=128, vmem_limit_bytes=64 * 1024 * 1024):
    N, Cin, H, W = src.shape
    assert N == bsz * seq_len
    S = seq_len * H * W

    # pos_embed = self.pos_encoder(src): spatial sine broadcast over seq_len,
    # assembled directly in [B, S, C] token order (t, h, w)
    pos_sp = sine_pos_embed(bsz, H, W, d_model)                     # [B, H, W, C] f32
    pos_bsc_f32 = jnp.broadcast_to(
        pos_sp[:, None], (bsz, seq_len, H, W, d_model)).reshape(bsz, S, d_model)
    pos_bsc = pos_bsc_f32.astype(jnp.bfloat16)

    # src = self.input_proj(src); bf16 residual stream, NCHW read directly.
    src_bf16 = src.astype(jnp.bfloat16)
    y = conv1x1_proj(src_bf16, params["proj_w"], params["proj_b"],
                     block_hw=block_hw, vmem_limit_bytes=vmem_limit_bytes)
    x_bsc = y.reshape(bsz, S, d_model)                              # [B, S, C] bf16

    # mask = zeros([bsz, seq_len*h*w], bool)
    mask = jnp.zeros((bsz, S), dtype=bool)

    for lp in params["layers"]:
        x_bsc = encoder_layer(x_bsc, pos_bsc, lp, nheads,
                              block_s=block_s, block_q=block_q,
                              block_kv=block_kv,
                              vmem_limit_bytes=vmem_limit_bytes)

    # module returns sequence-major tensors (f32 at the boundary)
    hs = jnp.transpose(x_bsc, (1, 0, 2)).astype(jnp.float32)        # [S, B, C]
    pos_sbc = jnp.transpose(pos_bsc_f32, (1, 0, 2))                 # [S, B, C]
    return hs, mask, pos_sbc


# ----------------------------------------------------------------------------
# parameter initialization (x @ W convention, (in, out) shapes) and
# kernel-ready preparation (fused QK weight, folded scale, bf16 casts)
# ----------------------------------------------------------------------------
def init_params(key, d_model, dim_ff, n_layers):
    std = 0.05
    ks = jax.random.split(key, 2 + n_layers)
    params = {
        "proj_w": jax.random.normal(ks[0], (dim_ff, d_model), jnp.float32) * std,
        "proj_b": jax.random.normal(ks[1], (1, d_model), jnp.float32) * std,
        "layers": [],
    }
    for i in range(n_layers):
        lk = jax.random.split(ks[2 + i], 12)
        params["layers"].append({
            "wq": jax.random.normal(lk[0], (d_model, d_model), jnp.float32) * std,
            "bq": jax.random.normal(lk[1], (1, d_model), jnp.float32) * std,
            "wk": jax.random.normal(lk[2], (d_model, d_model), jnp.float32) * std,
            "bk": jax.random.normal(lk[3], (1, d_model), jnp.float32) * std,
            "wv": jax.random.normal(lk[4], (d_model, d_model), jnp.float32) * std,
            "bv": jax.random.normal(lk[5], (1, d_model), jnp.float32) * std,
            "wo": jax.random.normal(lk[6], (d_model, d_model), jnp.float32) * std,
            "bo": jax.random.normal(lk[7], (1, d_model), jnp.float32) * std,
            "w1": jax.random.normal(lk[8], (d_model, dim_ff), jnp.float32) * std,
            "b1": jax.random.normal(lk[9], (1, dim_ff), jnp.float32) * std,
            "w2": jax.random.normal(lk[10], (dim_ff, d_model), jnp.float32) * std,
            "b2": jax.random.normal(lk[11], (1, d_model), jnp.float32) * std,
            "ln1_g": jnp.ones((1, d_model), jnp.float32),
            "ln1_b": jnp.zeros((1, d_model), jnp.float32),
            "ln2_g": jnp.ones((1, d_model), jnp.float32),
            "ln2_b": jnp.zeros((1, d_model), jnp.float32),
        })
    return params


def prepare_params(raw, nheads):
    """Fuse q/k weights, fold the 1/sqrt(hd) scale into q, cast matmul weights
    to bf16.  (Real PyTorch checkpoints store (out, in) weights -> transpose.)"""
    d_model = raw["proj_w"].shape[1]
    hd = d_model // nheads
    scale = 1.0 / math.sqrt(hd)

    layers = []
    for lp in raw["layers"]:
        wqk = jnp.concatenate([lp["wq"] * scale, lp["wk"]], axis=1)   # (C, 2C)
        bqk = jnp.concatenate([lp["bq"] * scale, lp["bk"]], axis=1)   # (1, 2C)
        layers.append({
            "wqk": wqk.astype(jnp.bfloat16), "bqk": bqk.astype(jnp.float32),
            "wv": lp["wv"].astype(jnp.bfloat16), "bv": lp["bv"],
            "wo": lp["wo"].astype(jnp.bfloat16), "bo": lp["bo"],
            "w1": lp["w1"].astype(jnp.bfloat16), "b1": lp["b1"],
            "w2": lp["w2"].astype(jnp.bfloat16), "b2": lp["b2"],
            "ln1_g": lp["ln1_g"], "ln1_b": lp["ln1_b"],
            "ln2_g": lp["ln2_g"], "ln2_b": lp["ln2_b"],
        })
    return {"proj_w": raw["proj_w"].astype(jnp.bfloat16),
            "proj_b": raw["proj_b"],
            "layers": layers}


if __name__ == "__main__":
    # small, lane-aligned, shape-consistent config
    bsz, seq_len = 2, 2
    d_model, nheads, dim_ff = 128, 4, 256
    enc_layers = 2
    H = W = 8                                   # S = seq_len*H*W = 128

    key = jax.random.PRNGKey(0)
    k_src, k_par = jax.random.split(key)
    src = jax.random.normal(k_src, (bsz * seq_len, dim_ff, H, W), jnp.float32)
    raw_params = init_params(k_par, d_model, dim_ff, enc_layers)
    params = prepare_params(raw_params, nheads)

    hs, mask, pos_embed = spatio_temp_encoder_forward(
        src, params, bsz=bsz, seq_len=seq_len, d_model=d_model, nheads=nheads,
        block_hw=128, block_s=64, block_q=64, block_kv=64)
    hs = jax.block_until_ready(hs)
    mask = jax.block_until_ready(mask)
    pos_embed = jax.block_until_ready(pos_embed)

    S = seq_len * H * W
    assert hs.shape == (S, bsz, d_model)
    assert mask.shape == (bsz, S) and mask.dtype == jnp.bool_ and not bool(mask.any())
    assert pos_embed.shape == (S, bsz, d_model)
    assert bool(jnp.isfinite(hs).all()) and bool(jnp.isfinite(pos_embed).all())
    print("KERNEL_OK")
</pallas_src>

<mosaic_0001>
module attributes {stable_mosaic.version = 11 : i64} {
  func.func @_conv1x1_kernel(%arg0: i32, %arg1: i32, %arg2: memref<1x256x64xbf16, #tpu.memory_space<vmem>>, %arg3: memref<256x128xbf16, #tpu.memory_space<vmem>>, %arg4: memref<1x128xf32, #tpu.memory_space<vmem>>, %arg5: memref<1x64x128xbf16, #tpu.memory_space<vmem>>) attributes {dimension_semantics = [#tpu.dimension_semantics<parallel>, #tpu.dimension_semantics<parallel>], iteration_bounds = array<i64: 4, 1>, scalar_prefetch = 0 : i64, scratch_operands = 0 : i64, tpu.core_type = #tpu.core_type<tc>, window_params = [{transform_indices = @transform_0, window_bounds = array<i64: 1, 256, 64>}, {pipeline_mode = #tpu.pipeline_mode<synchronous>, transform_indices = @transform_1, window_bounds = array<i64: 256, 128>}, {pipeline_mode = #tpu.pipeline_mode<synchronous>, transform_indices = @transform_2, window_bounds = array<i64: 1, 128>}, {transform_indices = @transform_3, window_bounds = array<i64: 1, 64, 128>}]} {
    %c0 = arith.constant 0 : index
    %c0_0 = arith.constant 0 : index
    %c0_1 = arith.constant 0 : index
    %0 = vector.load %arg2[%c0, %c0_0, %c0_1] : memref<1x256x64xbf16, #tpu.memory_space<vmem>>, vector<1x256x64xbf16>
    %1 = vector.shape_cast %0 : vector<1x256x64xbf16> to vector<256x64xbf16>
    %c0_2 = arith.constant 0 : index
    %c0_3 = arith.constant 0 : index
    %2 = vector.load %arg3[%c0_2, %c0_3] : memref<256x128xbf16, #tpu.memory_space<vmem>>, vector<256x128xbf16>
    %cst = arith.constant dense<0.000000e+00> : vector<64x128xf32>
    %3 = tpu.matmul %1, %2, %cst {dimension_numbers = #tpu.dot_dimension_numbers<[0], [0], [1], [1], [0, 1, 1, 1], [], []>} : vector<256x64xbf16>, vector<256x128xbf16>, vector<64x128xf32> -> vector<64x128xf32>
    %c0_4 = arith.constant 0 : index
    %c0_5 = arith.constant 0 : index
    %4 = vector.load %arg4[%c0_4, %c0_5] : memref<1x128xf32, #tpu.memory_space<vmem>>, vector<1x128xf32>
    %5 = vector.broadcast %4 : vector<1x128xf32> to vector<64x128xf32>
    %6 = arith.addf %3, %5 : vector<64x128xf32>
    %7 = arith.truncf %6 : vector<64x128xf32> to vector<64x128xbf16>
    %c0_6 = arith.constant 0 : index
    %c0_7 = arith.constant 0 : index
    %c0_8 = arith.constant 0 : index
    %8 = vector.load %arg5[%c0_6, %c0_7, %c0_8] : memref<1x64x128xbf16, #tpu.memory_space<vmem>>, vector<1x64x128xbf16>
    %9 = vector.shape_cast %8 : vector<1x64x128xbf16> to vector<64x128xbf16>
    %10 = vector.shape_cast %7 : vector<64x128xbf16> to vector<1x64x128xbf16>
    tpu.vector_store %arg5[%c0_6, %c0_7, %c0_8], %10 {strides = array<i32>} : memref<1x64x128xbf16, #tpu.memory_space<vmem>>, vector<1x64x128xbf16>,
    return
  }
  func.func @transform_0(%arg0: i32, %arg1: i32) -> (i32, i32, i32) {
    %c0_i32 = arith.constant 0 : i32
    %c0_i32_0 = arith.constant 0 : i32
    return %arg0, %c0_i32, %arg1 : i32, i32, i32
  }
  func.func @transform_1(%arg0: i32, %arg1: i32) -> (i32, i32) {
    %c0_i32 = arith.constant 0 : i32
    %c0_i32_0 = arith.constant 0 : i32
    %c0_i32_1 = arith.constant 0 : i32
    return %c0_i32, %c0_i32_0 : i32, i32
  }
  func.func @transform_2(%arg0: i32, %arg1: i32) -> (i32, i32) {
    %c0_i32 = arith.constant 0 : i32
    %c0_i32_0 = arith.constant 0 : i32
    %c0_i32_1 = arith.constant 0 : i32
    return %c0_i32, %c0_i32_0 : i32, i32
  }
  func.func @transform_3(%arg0: i32, %arg1: i32) -> (i32, i32, i32) {
    %c0_i32 = arith.constant 0 : i32
    %c0_i32_0 = arith.constant 0 : i32
    return %arg0, %arg1, %c0_i32 : i32, i32, i32
  }
}

</mosaic_0001>

<llo_original>
// kernel: tpu_custom_call.1
$region0: #{tpu_custom_call.1}
  #allocation0 [shape = 'u32[]', space=smem, size = 0x4, offset = 0x4, fixed_abs, tag = 'smem constant byte address 0x4 - core index']
  #allocation1 [shape = 'u32[72,128]{1,0:T(1,128)}', space=vmem, size = 0x9000, scoped, tag = 'internal scratch']
  %s0 = inlined_call_operand.vmem [shape: bf16[4,256,64], index: 0, kind: input, shape index: {}]
  %s1 = inlined_call_operand.vmem [shape: bf16[256,128], index: 1, kind: input, shape index: {}]
  %s2 = inlined_call_operand.vmem [shape: f32[1,128], index: 2, kind: input, shape index: {}]
  %s3 = inlined_call_operand.hbm [shape: bf16[4,64,128], index: 3, kind: output, shape index: {}]
  %s4 = sld [smem:[#allocation0]]
  $region45: #{tpu_custom_call.1} parent=0
    _
  %s6 = ssub.s32 1, %s4
  %s7 = scalar_select 0, %s6, %s4
  $region1: #{tpu_custom_call.1} parent=0
    #allocation2 [shape = 'u8[32768]{0}', space=vmem, size = 0x8000, scoped, tag = 'output window, operand 0']
    #allocation3 [shape = 's32[2]{0}', space=sflag, size = 0x8, scoped, tag = 'scoped memory for tpu_custom_call.1']
    %8 = vsyncpa [#allocation3], 0
    %s9 = scalar_lea.sflag [#allocation3], 1
    %10 = vsyncpa %s9, 0
    loop: start=0, step=1, limit=6
    $region2: #{tpu_custom_call.1} parent=1 // loop_pre_header
      _
    $region3: #{tpu_custom_call.1} parent=1 // loop_header
      %s12 = sphi 0, %s16
      %p13 = scmp.ge.s32.totalorder %s12, 6
      %s19 = sphi 0, %s31
      %s20 = sphi 0, %s27
      %s21 = sphi 0, %s19
      %s22 = sphi 0, %s20
      %s23 = sphi 0, %s21
      %s24 = sphi 0, %s22
      %s36 = sphi 0, %s38
      %s39 = sphi 0, %s36
      %s40 = sphi 0, %s39
      %s56 = sphi 0, %s40
      %s60 = sphi 0, %s60
      %s62 = sphi 0, %s60
      %s63 = sphi 0, %s62
      %s77 = sphi 0, %s63
      %s81 = sphi 0, %s81
      %s83 = sphi 0, %s81
      %s84 = sphi 0, %s83
      %s98 = sphi 0, %s84
      %s106 = sphi 0, %s108
      %s109 = sphi 0, %s106
      %s110 = sphi 0, %s109
      %s126 = sphi 0, %s110
    $region4: #{tpu_custom_call.1} parent=1 // loop_header_branch
      %15 = sbr.rel (%p13) target = $region8
    $region5: #{tpu_custom_call.1} parent=1 // loop_body
      %s17 = ssub.s32 %s12, 1
      %s18 = ssub.s32 %s12, 2
      %s25 = sadd.s32 1, %s20
      %p26 = scmp.ge.s32.totalorder %s25, 1
      %s27 = scalar_select %p26, 0, %s25
      %s28 = sadd.s32 1, %s19
      %s29 = scalar_select %p26, %s28, %s19
      %p30 = scmp.ge.s32.totalorder %s29, 4
      %s31 = scalar_select %p30, 0, %s29
      %s32 = ssub.s32 %s19, %s31
      %s33 = ssub.s32 %s20, %s27
      %s34 = sor.u32 %s32, %s33
      %p35 = scmp.eq.s32.totalorder %s34, 0
      %s37 = sadd.s32 %s36, 1
      %s38 = scalar_select %p35, %s36, %s37
      %p41 = pneg %p35
      %p42 = scmp.eq.s32.totalorder %s12, 3
      %p43 = por %p41, %p42
      %p44 = scmp.ne.s32.totalorder %s36, %s39
      %p45 = scmp.eq.s32.totalorder %s12, 0
      %p46 = por %p44, %p45
      %p47 = scmp.ne.s32.totalorder %s36, %s39
      %p48 = scmp.eq.s32.totalorder %s17, 3
      %p49 = por %p47, %p48
      %p50 = scmp.ne.s32.totalorder %s39, %s40
      %p51 = scmp.eq.s32.totalorder %s17, 0
      %p52 = por %p50, %p51
      %p53 = scmp.ne.s32.totalorder %s39, %s40
      %p54 = scmp.eq.s32.totalorder %s18, 3
      %p55 = por %p53, %p54
      %p57 = scmp.ne.s32.totalorder %s40, %s56
      %p58 = scmp.eq.s32.totalorder %s18, 0
      %p59 = por %p57, %p58
      %s61 = sadd.s32 %s60, 1
      %p64 = scmp.eq.s32.totalorder %s12, 3
      %p65 = scmp.ne.s32.totalorder %s60, %s62
      %p66 = scmp.eq.s32.totalorder %s12, 0
      %p67 = por %p65, %p66
      %p68 = scmp.ne.s32.totalorder %s60, %s62
      %p69 = scmp.eq.s32.totalorder %s17, 3
      %p70 = por %p68, %p69
      %p71 = scmp.ne.s32.totalorder %s62, %s63
      %p72 = scmp.eq.s32.totalorder %s17, 0
      %p73 = por %p71, %p72
      %p74 = scmp.ne.s32.totalorder %s62, %s63
      %p75 = scmp.eq.s32.totalorder %s18, 3
      %p76 = por %p74, %p75
      %p78 = scmp.ne.s32.totalorder %s63, %s77
      %p79 = scmp.eq.s32.totalorder %s18, 0
      %p80 = por %p78, %p79
      %s82 = sadd.s32 %s81, 1
      %p85 = scmp.eq.s32.totalorder %s12, 3
      %p86 = scmp.ne.s32.totalorder %s81, %s83
      %p87 = scmp.eq.s32.totalorder %s12, 0
      %p88 = por %p86, %p87
      %p89 = scmp.ne.s32.totalorder %s81, %s83
      %p90 = scmp.eq.s32.totalorder %s17, 3
      %p91 = por %p89, %p90
      %p92 = scmp.ne.s32.totalorder %s83, %s84
      %p93 = scmp.eq.s32.totalorder %s17, 0
      %p94 = por %p92, %p93
      %p95 = scmp.ne.s32.totalorder %s83, %s84
      %p96 = scmp.eq.s32.totalorder %s18, 3
      %p97 = por %p95, %p96
      %p99 = scmp.ne.s32.totalorder %s84, %s98
      %p100 = scmp.eq.s32.totalorder %s18, 0
      %p101 = por %p99, %p100
      %s102 = ssub.s32 %s19, %s31
      %s103 = ssub.s32 %s20, %s27
      %s104 = sor.u32 %s102, %s103
      %p105 = scmp.eq.s32.totalorder %s104, 0
      %s107 = sadd.s32 %s106, 1
      %s108 = scalar_select %p105, %s106, %s107
      %p111 = pneg %p105
      %p112 = scmp.eq.s32.totalorder %s12, 3
      %p113 = por %p111, %p112
      %p114 = scmp.ne.s32.totalorder %s106, %s109
      %p115 = scmp.eq.s32.totalorder %s12, 0
      %p116 = por %p114, %p115
      %p117 = scmp.ne.s32.totalorder %s106, %s109
      %p118 = scmp.eq.s32.totalorder %s17, 3
      %p119 = por %p117, %p118
      %p120 = scmp.ne.s32.totalorder %s109, %s110
      %p121 = scmp.eq.s32.totalorder %s17, 0
      %p122 = por %p120, %p121
      %p123 = scmp.ne.s32.totalorder %s109, %s110
      %p124 = scmp.eq.s32.totalorder %s18, 3
      %p125 = por %p123, %p124
      %p127 = scmp.ne.s32.totalorder %s110, %s126
      %p128 = scmp.eq.s32.totalorder %s18, 0
      %p129 = por %p127, %p128
      %p130 = scmp.le.s32.totalorder 1, %s12
      %p131 = scmp.lt.s32.totalorder %s12, 5
      %p132 = pnand %p130, %p131
      %p133 = pneg %p132
      // Predicated region
      $region9: #{tpu_custom_call.1} parent=5 // pred_check
        _
      $region10: #{tpu_custom_call.1} parent=5 // pred_check_branch
        %135 = sbr.rel (%p132) target = $region12
      $region11: #{tpu_custom_call.1} parent=5 // pred_region
        %s136 = ssub.s32 %s12, 1
        // Predicated region
        $region13: #{tpu_custom_call.1} parent=11 // pred_check
          %p137 = pneg %p73
        $region14: #{tpu_custom_call.1} parent=11 // pred_check_branch
          %139 = sbr.rel (%p137) target = $region16
        $region15: #{tpu_custom_call.1} parent=11 // pred_region
          _
        $region16: #{tpu_custom_call.1} parent=11 // pred_fallthru
          _
        // Predicated region
        $region17: #{tpu_custom_call.1} parent=11 // pred_check
          %p140 = pneg %p94
        $region18: #{tpu_custom_call.1} parent=11 // pred_check_branch
          %142 = sbr.rel (%p140) target = $region20
        $region19: #{tpu_custom_call.1} parent=11 // pred_region
          _
        $region20: #{tpu_custom_call.1} parent=11 // pred_fallthru
          _
      $region12: #{tpu_custom_call.1} parent=5 // pred_fallthru
        _
      %p143 = scmp.lt.s32.totalorder %s12, 4
      // Predicated region
      $region21: #{tpu_custom_call.1} parent=5 // pred_check
        %p144 = pneg %p143
      $region22: #{tpu_custom_call.1} parent=5 // pred_check_branch
        %146 = sbr.rel (%p144) target = $region24
      $region23: #{tpu_custom_call.1} parent=5 // pred_region
        // Predicated region
        $region25: #{tpu_custom_call.1} parent=23 // pred_check
          %p147 = pneg %p46
        $region26: #{tpu_custom_call.1} parent=23 // pred_check_branch
          %149 = sbr.rel (%p147) target = $region28
        $region27: #{tpu_custom_call.1} parent=23 // pred_region
          %p150 = scmp.lt.s32.totalorder %s19, 3
          %s151 = scalar_select %p150, %s19, 3
          %p152 = scmp.lt.s32.totalorder %s20, 0
          %s153 = scalar_select %p152, %s20, 0
          %s154 = smul.addr %s151, 32
          %s155 = sadd.s32 %s153, %s154
          %s156 = smul.addr %s155, 4
          %s157 = scalar_lea.vmem %s0, %s156
        $region28: #{tpu_custom_call.1} parent=23 // pred_fallthru
          _
      $region24: #{tpu_custom_call.1} parent=5 // pred_fallthru
        _
      %p158 = scmp.le.s32.totalorder 1, %s12
      %p159 = scmp.lt.s32.totalorder %s12, 5
      %p160 = pnand %p158, %p159
      %p161 = pneg %p160
      // Predicated region
      $region29: #{tpu_custom_call.1} parent=5 // pred_check
        _
      $region30: #{tpu_custom_call.1} parent=5 // pred_check_branch
        %163 = sbr.rel (%p160) target = $region32
      $region31: #{tpu_custom_call.1} parent=5 // pred_region
        %s164 = ssub.s32 %s12, 1
        %p165 = scmp.lt.s32.totalorder %s21, 3
        %s166 = scalar_select %p165, %s21, 3
        %p167 = scmp.lt.s32.totalorder %s22, 0
        %s168 = scalar_select %p167, %s22, 0
        %s169 = smul.addr %s166, 32
        %s170 = sadd.s32 %s168, %s169
        %s171 = smul.addr %s170, 4
        %s172 = scalar_lea.vmem %s0, %s171
        %p173 = pneg %p52
        %p174 = pneg %p49
        %p175 = pneg %p73
        %p176 = pneg %p70
        %p177 = pneg %p94
        %p178 = pneg %p91
        %p179 = pneg %p122
        %p180 = pneg %p119
        %s181 = sand.u32 %s109, 1
        %s182 = scalar_lea.sflag [#allocation3], %s181
        %s183 = sand.u32 %s109, 1
        %s184 = smul.addr %s183, 32
        %s185 = scalar_lea.vmem [#allocation2], %s184
        %p186 = scmp.lt.s32.totalorder %s21, 3
        %s187 = scalar_select %p186, %s21, 3
        %p188 = scmp.lt.s32.totalorder %s22, 0
        %s189 = scalar_select %p188, %s22, 0
        %s190 = smul.addr %s187, 32
        %s191 = sadd.s32 %s189, %s190
        %s192 = smul.addr %s191, 4
        %s193 = scalar_lea.vmem %s0, %s192
        %s194 = smul.u32 8, %s22
        %v195 = vld [vmem:[%s193] sm:$0xf]
        %v196 = vld [vmem:[%s193 + $0x4] sm:$0xf]
        %v197 = vld [vmem:[%s193 + $0x8] sm:$0xf]
        %v198 = vld [vmem:[%s193 + $0xc] sm:$0xf]
        %v199 = vld [vmem:[%s193 + $0x10] sm:$0xf]
        %v200 = vld [vmem:[%s193 + $0x14] sm:$0xf]
        %v201 = vld [vmem:[%s193 + $0x18] sm:$0xf]
        %v202 = vld [vmem:[%s193 + $0x1c] sm:$0xf]
        %v203 = vld [vmem:[%s193 + $0x20] sm:$0xf]
        %v204 = vld [vmem:[%s193 + $0x24] sm:$0xf]
        %v205 = vld [vmem:[%s193 + $0x28] sm:$0xf]
        %v206 = vld [vmem:[%s193 + $0x2c] sm:$0xf]
        %v207 = vld [vmem:[%s193 + $0x30] sm:$0xf]
        %v208 = vld [vmem:[%s193 + $0x34] sm:$0xf]
        %v209 = vld [vmem:[%s193 + $0x38] sm:$0xf]
        %v210 = vld [vmem:[%s193 + $0x3c] sm:$0xf]
        %v211 = vld [vmem:[%s193 + $0x40] sm:$0xf]
        %v212 = vld [vmem:[%s193 + $0x44] sm:$0xf]
        %v213 = vld [vmem:[%s193 + $0x48] sm:$0xf]
        %v214 = vld [vmem:[%s193 + $0x4c] sm:$0xf]
        %v215 = vld [vmem:[%s193 + $0x50] sm:$0xf]
        %v216 = vld [vmem:[%s193 + $0x54] sm:$0xf]
        %v217 = vld [vmem:[%s193 + $0x58] sm:$0xf]
        %v218 = vld [vmem:[%s193 + $0x5c] sm:$0xf]
        %v219 = vld [vmem:[%s193 + $0x60] sm:$0xf]
        %v220 = vld [vmem:[%s193 + $0x64] sm:$0xf]
        %v221 = vld [vmem:[%s193 + $0x68] sm:$0xf]
        %v222 = vld [vmem:[%s193 + $0x6c] sm:$0xf]
        %v223 = vld [vmem:[%s193 + $0x70] sm:$0xf]
        %v224 = vld [vmem:[%s193 + $0x74] sm:$0xf]
        %v225 = vld [vmem:[%s193 + $0x78] sm:$0xf]
        %v226 = vld [vmem:[%s193 + $0x7c] sm:$0xf]
        %v227 = vld [vmem:[%s1] sm:$0xf]
        %v228 = vld [vmem:[%s1 + $0x4] sm:$0xf]
        %v229 = vld [vmem:[%s1 + $0x8] sm:$0xf]
        %v230 = vld [vmem:[%s1 + $0xc] sm:$0xf]
        %v231 = vld [vmem:[%s1 + $0x10] sm:$0xf]
        %v232 = vld [vmem:[%s1 + $0x14] sm:$0xf]
        %v233 = vld [vmem:[%s1 + $0x18] sm:$0xf]
        %v234 = vld [vmem:[%s1 + $0x1c] sm:$0xf]
        %v235 = vld [vmem:[%s1 + $0x20] sm:$0xf]
        %v236 = vld [vmem:[%s1 + $0x24] sm:$0xf]
        %v237 = vld [vmem:[%s1 + $0x28] sm:$0xf]
        %v238 = vld [vmem:[%s1 + $0x2c] sm:$0xf]
        %v239 = vld [vmem:[%s1 + $0x30] sm:$0xf]
        %v240 = vld [vmem:[%s1 + $0x34] sm:$0xf]
        %v241 = vld [vmem:[%s1 + $0x38] sm:$0xf]
        %v242 = vld [vmem:[%s1 + $0x3c] sm:$0xf]
        %v243 = vld [vmem:[%s1 + $0x40] sm:$0xf]
        %v244 = vld [vmem:[%s1 + $0x44] sm:$0xf]
        %v245 = vld [vmem:[%s1 + $0x48] sm:$0xf]
        %v246 = vld [vmem:[%s1 + $0x4c] sm:$0xf]
        %v247 = vld [vmem:[%s1 + $0x50] sm:$0xf]
        %v248 = vld [vmem:[%s1 + $0x54] sm:$0xf]
        %v249 = vld [vmem:[%s1 + $0x58] sm:$0xf]
        %v250 = vld [vmem:[%s1 + $0x5c] sm:$0xf]
        %v251 = vld [vmem:[%s1 + $0x60] sm:$0xf]
        %v252 = vld [vmem:[%s1 + $0x64] sm:$0xf]
        %v253 = vld [vmem:[%s1 + $0x68] sm:$0xf]
        %v254 = vld [vmem:[%s1 + $0x6c] sm:$0xf]
        %v255 = vld [vmem:[%s1 + $0x70] sm:$0xf]
        %v256 = vld [vmem:[%s1 + $0x74] sm:$0xf]
        %v257 = vld [vmem:[%s1 + $0x78] sm:$0xf]
        %v258 = vld [vmem:[%s1 + $0x7c] sm:$0xf]
        %v259 = vld [vmem:[%s2] sm:$0x1]
        %v261 = vperm.slane %v259, 0
        %v295 = vunpack.c.l.b16 %v195
        %v296 = vunpack.c.l.b16 %v196
        %v297 = vunpack.c.l.b16 %v197
        %v298 = vunpack.c.l.b16 %v198
        %v299 = vunpack.c.l.b16 %v199
        %v300 = vunpack.c.l.b16 %v200
        %v301 = vunpack.c.l.b16 %v201
        %v302 = vunpack.c.l.b16 %v202
        %v303 = vunpack.c.l.b16 %v203
        %v304 = vunpack.c.l.b16 %v204
        %v305 = vunpack.c.l.b16 %v205
        %v306 = vunpack.c.l.b16 %v206
        %v307 = vunpack.c.l.b16 %v207
        %v308 = vunpack.c.l.b16 %v208
        %v309 = vunpack.c.l.b16 %v209
        %v310 = vunpack.c.l.b16 %v210
        %v311 = vunpack.c.l.b16 %v211
        %v312 = vunpack.c.l.b16 %v212
        %v313 = vunpack.c.l.b16 %v213
        %v314 = vunpack.c.l.b16 %v214
        %v315 = vunpack.c.l.b16 %v215
        %v316 = vunpack.c.l.b16 %v216
        %v317 = vunpack.c.l.b16 %v217
        %v318 = vunpack.c.l.b16 %v218
        %v319 = vunpack.c.l.b16 %v219
        %v320 = vunpack.c.l.b16 %v220
        %v321 = vunpack.c.l.b16 %v221
        %v322 = vunpack.c.l.b16 %v222
        %v323 = vunpack.c.l.b16 %v223
        %v324 = vunpack.c.l.b16 %v224
        %v325 = vunpack.c.l.b16 %v225
        %v326 = vunpack.c.l.b16 %v226
        %v327 = vpack.c.b16 %v296, %v295
        %v328 = vpack.c.b16 %v298, %v297
        %v329 = vpack.c.b16 %v300, %v299
        %v330 = vpack.c.b16 %v302, %v301
        %v331 = vpack.c.b16 %v304, %v303
        %v332 = vpack.c.b16 %v306, %v305
        %v333 = vpack.c.b16 %v308, %v307
        %v334 = vpack.c.b16 %v310, %v309
        %v335 = vpack.c.b16 %v312, %v311
        %v336 = vpack.c.b16 %v314, %v313
        %v337 = vpack.c.b16 %v316, %v315
        %v338 = vpack.c.b16 %v318, %v317
        %v339 = vpack.c.b16 %v320, %v319
        %v340 = vpack.c.b16 %v322, %v321
        %v341 = vpack.c.b16 %v324, %v323
        %v342 = vpack.c.b16 %v326, %v325
        %359 = vxpose.xlu0.c.b16.start [1/8] %v327, 128
        %360 = vxpose.xlu0.c.b16.cont [2/8] %v328, 128
        %361 = vxpose.xlu0.c.b16.cont [3/8] %v329, 128
        %362 = vxpose.xlu0.c.b16.cont [4/8] %v330, 128
        %363 = vxpose.xlu0.c.b16.cont [5/8] %v331, 128
        %364 = vxpose.xlu0.c.b16.cont [6/8] %v332, 128
        %365 = vxpose.xlu0.c.b16.cont [7/8] %v333, 128
        %366 = vxpose.xlu0.c.b16.end [8/8] %v334, 128
        %v367 = vpop.trf.xlu0
        %v368 = vpop.trf.xlu0
        %v369 = vpop.trf.xlu0
        %v370 = vpop.trf.xlu0
        %v371 = vpop.trf.xlu0
        %v372 = vpop.trf.xlu0
        %v373 = vpop.trf.xlu0
        %v374 = vpop.trf.xlu0
        %375 = vxpose.xlu0.c.b16.start [1/8] %v335, 128
        %376 = vxpose.xlu0.c.b16.cont [2/8] %v336, 128
        %377 = vxpose.xlu0.c.b16.cont [3/8] %v337, 128
        %378 = vxpose.xlu0.c.b16.cont [4/8] %v338, 128
        %379 = vxpose.xlu0.c.b16.cont [5/8] %v339, 128
        %380 = vxpose.xlu0.c.b16.cont [6/8] %v340, 128
        %381 = vxpose.xlu0.c.b16.cont [7/8] %v341, 128
        %382 = vxpose.xlu0.c.b16.end [8/8] %v342, 128
        %v383 = vpop.trf.xlu0
        %v384 = vpop.trf.xlu0
        %v385 = vpop.trf.xlu0
        %v386 = vpop.trf.xlu0
        %v387 = vpop.trf.xlu0
        %v388 = vpop.trf.xlu0
        %v389 = vpop.trf.xlu0
        %v390 = vpop.trf.xlu0
        %v423 = vunpack.c.l.b16 %v227
        %v424 = vunpack.c.l.b16 %v228
        %v425 = vunpack.c.l.b16 %v229
        %v426 = vunpack.c.l.b16 %v230
        %v427 = vunpack.c.l.b16 %v231
        %v428 = vunpack.c.l.b16 %v232
        %v429 = vunpack.c.l.b16 %v233
        %v430 = vunpack.c.l.b16 %v234
        %v431 = vunpack.c.l.b16 %v235
        %v432 = vunpack.c.l.b16 %v236
        %v433 = vunpack.c.l.b16 %v237
        %v434 = vunpack.c.l.b16 %v238
        %v435 = vunpack.c.l.b16 %v239
        %v436 = vunpack.c.l.b16 %v240
        %v437 = vunpack.c.l.b16 %v241
        %v438 = vunpack.c.l.b16 %v242
        %v439 = vunpack.c.l.b16 %v243
        %v440 = vunpack.c.l.b16 %v244
        %v441 = vunpack.c.l.b16 %v245
        %v442 = vunpack.c.l.b16 %v246
        %v443 = vunpack.c.l.b16 %v247
        %v444 = vunpack.c.l.b16 %v248
        %v445 = vunpack.c.l.b16 %v249
        %v446 = vunpack.c.l.b16 %v250
        %v447 = vunpack.c.l.b16 %v251
        %v448 = vunpack.c.l.b16 %v252
        %v449 = vunpack.c.l.b16 %v253
        %v450 = vunpack.c.l.b16 %v254
        %v451 = vunpack.c.l.b16 %v255
        %v452 = vunpack.c.l.b16 %v256
        %v453 = vunpack.c.l.b16 %v257
        %v454 = vunpack.c.l.b16 %v258
        %v455 = vpack.c.b16 %v424, %v423
        %v456 = vpack.c.b16 %v426, %v425
        %v457 = vpack.c.b16 %v428, %v427
        %v458 = vpack.c.b16 %v430, %v429
        %v459 = vpack.c.b16 %v432, %v431
        %v460 = vpack.c.b16 %v434, %v433
        %v461 = vpack.c.b16 %v436, %v435
        %v462 = vpack.c.b16 %v438, %v437
        %v463 = vpack.c.b16 %v440, %v439
        %v464 = vpack.c.b16 %v442, %v441
        %v465 = vpack.c.b16 %v444, %v443
        %v466 = vpack.c.b16 %v446, %v445
        %v467 = vpack.c.b16 %v448, %v447
        %v468 = vpack.c.b16 %v450, %v449
        %v469 = vpack.c.b16 %v452, %v451
        %v470 = vpack.c.b16 %v454, %v453
        %487 = vmatpush.bf16.msra.mxu0 %v462
        %488 = vmatpush.bf16.msra.mxu0 %v461
        %489 = vmatpush.bf16.msra.mxu0 %v460
        %490 = vmatpush.bf16.msra.mxu0 %v459
        %491 = vmatpush.bf16.msra.mxu0 %v458
        %492 = vmatpush.bf16.msra.mxu0 %v457
        %493 = vmatpush.bf16.msra.mxu0 %v456
        %494 = vmatpush.bf16.msra.mxu0 %v455
        %495 = vmatmul.bf16.gmra.mxu0 %v367
        %v496 = vpop.f32.mrf.mxu0
        %v497 = vadd.f32 %v261, %v496
        %v498 = vpop.f32.mrf.mxu0
        %v499 = vadd.f32 %v261, %v498
        %500 = vmatmul.bf16.gmra.mxu0 %v368
        %v501 = vpop.f32.mrf.mxu0
        %v502 = vadd.f32 %v261, %v501
        %v503 = vpop.f32.mrf.mxu0
        %v504 = vadd.f32 %v261, %v503
        %505 = vmatmul.bf16.gmra.mxu0 %v369
        %v506 = vpop.f32.mrf.mxu0
        %v507 = vadd.f32 %v261, %v506
        %v508 = vpop.f32.mrf.mxu0
        %v509 = vadd.f32 %v261, %v508
        %510 = vmatmul.bf16.gmra.mxu0 %v370
        %v511 = vpop.f32.mrf.mxu0
        %v512 = vadd.f32 %v261, %v511
        %v513 = vpop.f32.mrf.mxu0
        %v514 = vadd.f32 %v261, %v513
        %515 = vdwg.mxu0
        %516 = vmatpush.bf16.msra.mxu0 %v470
        %517 = vmatpush.bf16.msra.mxu0 %v469
        %518 = vmatpush.bf16.msra.mxu0 %v468
        %519 = vmatpush.bf16.msra.mxu0 %v467
        %520 = vmatpush.bf16.msra.mxu0 %v466
        %521 = vmatpush.bf16.msra.mxu0 %v465
        %522 = vmatpush.bf16.msra.mxu0 %v464
        %523 = vmatpush.bf16.msra.mxu0 %v463
        %524 = vmatmul.bf16.gmra.mxu0 %v383
        %v525 = vpop.f32.mrf.mxu0
        %v526 = vadd.f32 %v497, %v525
        %v527 = vpop.f32.mrf.mxu0
        %v528 = vadd.f32 %v499, %v527
        %529 = vmatmul.bf16.gmra.mxu0 %v384
        %v530 = vpop.f32.mrf.mxu0
        %v531 = vadd.f32 %v502, %v530
        %v532 = vpop.f32.mrf.mxu0
        %v533 = vadd.f32 %v504, %v532
        %534 = vmatmul.bf16.gmra.mxu0 %v385
        %v535 = vpop.f32.mrf.mxu0
        %v536 = vadd.f32 %v507, %v535
        %v537 = vpop.f32.mrf.mxu0
        %v538 = vadd.f32 %v509, %v537
        %539 = vmatmul.bf16.gmra.mxu0 %v386
        %v540 = vpop.f32.mrf.mxu0
        %v541 = vadd.f32 %v512, %v540
        %v542 = vpop.f32.mrf.mxu0
        %v543 = vadd.f32 %v514, %v542
        %544 = vdwg.mxu0
        %v545 = vpack.c.bf16 %v526, %v526
        %v546 = vpack.c.bf16 %v528, %v528
        %v547 = vpack.c.bf16 %v531, %v531
        %v548 = vpack.c.bf16 %v533, %v533
        %v549 = vpack.c.bf16 %v536, %v536
        %v550 = vpack.c.bf16 %v538, %v538
        %v551 = vpack.c.bf16 %v541, %v541
        %v552 = vpack.c.bf16 %v543, %v543
        %553 = vst [vmem:[%s185] sm:$0xf] %v545
        %554 = vst [vmem:[%s185 + $0x4] sm:$0xf] %v546
        %555 = vst [vmem:[%s185 + $0x8] sm:$0xf] %v547
        %556 = vst [vmem:[%s185 + $0xc] sm:$0xf] %v548
        %557 = vst [vmem:[%s185 + $0x10] sm:$0xf] %v549
        %558 = vst [vmem:[%s185 + $0x14] sm:$0xf] %v550
        %559 = vst [vmem:[%s185 + $0x18] sm:$0xf] %v551
        %560 = vst [vmem:[%s185 + $0x1c] sm:$0xf] %v552
        %s561 = sand.u32 %s109, 1
        %s562 = scalar_lea.sflag [#allocation3], %s561
        %s563 = sand.u32 %s109, 1
        %s564 = smul.addr %s563, 32
        %s565 = scalar_lea.vmem [#allocation2], %s564
        // Predicated region
        $region33: #{tpu_custom_call.1} parent=31 // pred_check
          %p566 = pneg %p119
        $region34: #{tpu_custom_call.1} parent=31 // pred_check_branch
          %568 = sbr.rel (%p566) target = $region36
        $region35: #{tpu_custom_call.1} parent=31 // pred_region
          %s569 = smul.u32 8, %s22
          %571 = vsyncadd %s562, 0
          %s572 = smul.addr %s21, 8
          %s573 = sadd.s32 %s569, %s572
          %s574 = smul.addr %s573, 4
          %s575 = scalar_lea.hbm %s3, %s574
          %s576 = sshll.u32 %s565, 4
          %s577 = int_to_ptr.vmem [resolvable:$true] %s576
          %s578 = sshll.u32 %s575, 4
          %s579 = int_to_ptr.hbm [resolvable:$true] %s578
          %584 = dma.vmem_to_hbm [thread:$0]  %s577, 512, %s579, %s562, 64, 64, 4
        $region36: #{tpu_custom_call.1} parent=31 // pred_fallthru
          _
      $region32: #{tpu_custom_call.1} parent=5 // pred_fallthru
        _
      %p585 = scmp.le.s32.totalorder 2, %s12
      // Predicated region
      $region37: #{tpu_custom_call.1} parent=5 // pred_check
        %p586 = pneg %p585
      $region38: #{tpu_custom_call.1} parent=5 // pred_check_branch
        %588 = sbr.rel (%p586) target = $region40
      $region39: #{tpu_custom_call.1} parent=5 // pred_region
        %s589 = ssub.s32 %s12, 2
        // Predicated region
        $region41: #{tpu_custom_call.1} parent=39 // pred_check
          %p590 = pneg %p125
        $region42: #{tpu_custom_call.1} parent=39 // pred_check_branch
          %592 = sbr.rel (%p590) target = $region44
        $region43: #{tpu_custom_call.1} parent=39 // pred_region
          %s593 = sand.u32 %s110, 1
          %s594 = scalar_lea.sflag [#allocation3], %s593
          %s595 = sand.u32 %s110, 1
          %s596 = smul.addr %s595, 32
          %s597 = scalar_lea.vmem [#allocation2], %s596
          %599 = dma.done %s594, 512
        $region44: #{tpu_custom_call.1} parent=39 // pred_fallthru
          _
      $region40: #{tpu_custom_call.1} parent=5 // pred_fallthru
        _
    $region6: #{tpu_custom_call.1} parent=1 // loop_footer
      %s16 = sadd.s32 1, %s12
    $region7: #{tpu_custom_call.1} parent=1 // loop_footer_branch
      %11 = sbr.rel target = $region3
    $region8: #{tpu_custom_call.1} parent=1 // loop_exit
      _
    %600 = vsyncpa [#allocation3], 1
    %s601 = scalar_lea.sflag [#allocation3], 1
    %602 = vsyncpa %s601, 1

</llo_original>
